<compile_context>
chip_gen: v5e
topology: v5e:2x2
jax: 0.10.0
libtpu: 0.0.40
codegen_flags: <defaults>
</compile_context>

<pallas_src>
import jax
import jax.numpy as jnp
from jax.experimental import pallas as pl
from jax.experimental.pallas import tpu as pltpu


def _make_focal_kernel(gamma, gamma_int, has_alpha, reduce_tile):
    def kernel(*refs):
        if has_alpha:
            logits_ref, targets_ref, alpha_ref, out_ref = refs
        else:
            logits_ref, targets_ref, out_ref = refs
            alpha_ref = None

        x = logits_ref[...].astype(jnp.float32)            # (TB, C)
        t = targets_ref[...]                                # (TB, 1) int32

        # Fused, numerically stable log-softmax gather: never materialize the
        # full log_probs tile or a float one-hot.
        m = jnp.max(x, axis=1, keepdims=True)               # (TB, 1)
        shifted = x - m                                      # (TB, C)
        lse = jnp.log(jnp.sum(jnp.exp(shifted), axis=1, keepdims=True))
        cls = jax.lax.broadcasted_iota(jnp.int32, x.shape, 1)
        picked = jnp.sum(jnp.where(cls == t, shifted, 0.0), axis=1,
                         keepdims=True)                      # (TB, 1)
        logp_t = picked - lse                                # (TB, 1)
        p_t = jnp.exp(logp_t)                                # (TB, 1)

        w = jnp.maximum(1.0 - p_t, 0.0)                      # clamp rounding
        if gamma_int is not None:
            # Square-and-multiply on the (TB, 1) column (no ones() init).
            fw, base, e = None, w, gamma_int
            if e == 0:
                fw = jnp.ones_like(w)
            while e > 0:
                if e & 1:
                    fw = base if fw is None else fw * base
                e >>= 1
                if e:
                    base = base * base
        else:
            g = jnp.float32(gamma)
            fw = jnp.where(w > 0.0,
                           jnp.exp(g * jnp.log(jnp.maximum(w, 1e-30))),
                           0.0)

        nloss = fw * logp_t                                  # (TB, 1)
        if has_alpha:
            nloss = nloss * alpha_ref[...]                   # pre-gathered alpha_t
        loss = jnp.where(t >= 0, -nloss, 0.0)                # pad rows -> exactly 0

        if reduce_tile:
            # One partial sum per tile: avoids B masked lane-1 stores plus an
            # O(B) HBM write+read for the epilogue reduction.
            out_ref[0] = jnp.sum(loss, axis=0, keepdims=True)   # (1, 1)
        else:
            out_ref[...] = loss                               # (TB, 1)
    return kernel


def _round_up(n, m):
    return ((n + m - 1) // m) * m


def focal_loss(inputs, targets, alpha=None, gamma=2.0, reduction="mean"):
    """Pallas TPU FocalLoss matching the PyTorch module's forward semantics.

    inputs : (B, C) float logits (native dtype is preserved for the DMA)
    targets: (B,)   integer class labels
    """
    B, C = inputs.shape
    itemsize = jnp.dtype(inputs.dtype).itemsize
    # Sublane packing multiple for the logits dtype: 8 f32, 16 bf16, 32 int8.
    sub_mult = max(8, 32 // itemsize)

    # --- VMEM-budgeted batch tile.
    try:
        vmem_cap = int(pltpu.get_tpu_info().vmem_capacity_bytes)
    except Exception:
        vmem_cap = 64 * 1024 * 1024          # v7x-safe floor
    usable = (vmem_cap * 3) // 4             # ~48 MiB v7x, ~96 MiB v5e/v6e
    # Per-element VMEM cost: double-buffered native-dtype input tile plus
    # ~4 live f32 full-tile temporaries inside the body.
    per_elem = 2 * itemsize + 4 * 4
    rows = usable // max(1, C * per_elem)
    rows = max(sub_mult, (rows // sub_mult) * sub_mult)

    b_pad_min = _round_up(B, sub_mult)
    TB = min(rows, b_pad_min)
    # Keep >= 2 grid steps when B allows it so both v7x TensorCores get work.
    if b_pad_min >= 2 * sub_mult:
        TB = min(TB, max(sub_mult, _round_up(-(-B // 2), sub_mult)))
    TB = max(sub_mult, TB)
    num_tiles = pl.cdiv(B, TB)
    B_pad = num_tiles * TB

    # --- pad batch; padded rows carry target = -1 -> masked to zero loss.
    if B_pad == B:
        logits_p = inputs
        targets_p = targets.astype(jnp.int32).reshape(B, 1)
    else:
        logits_p = jnp.pad(inputs, ((0, B_pad - B), (0, 0)))
        targets_p = jnp.pad(
            targets.astype(jnp.int32).reshape(B, 1),
            ((0, B_pad - B), (0, 0)),
            constant_values=-1,
        )

    has_alpha = alpha is not None
    args = [logits_p, targets_p]
    in_specs = [
        pl.BlockSpec((TB, C), lambda i: (i, 0)),   # logits (native dtype DMA)
        pl.BlockSpec((TB, 1), lambda i: (i, 0)),   # targets
    ]
    if has_alpha:
        # Gather alpha per-row in the wrapper (O(B)) instead of an O(TB*C)
        # multiply + cross-lane reduce per tile inside the kernel.
        if isinstance(alpha, (float, int)):
            alpha_vec = jnp.full((C,), float(alpha), dtype=jnp.float32)
        else:
            alpha_vec = jnp.asarray(alpha, dtype=jnp.float32).reshape(C)
        alpha_t = alpha_vec[targets.astype(jnp.int32)].reshape(B, 1)
        if B_pad != B:
            alpha_t = jnp.pad(alpha_t, ((0, B_pad - B), (0, 0)))  # pad rows -> 0
        args.append(alpha_t)
        in_specs.append(pl.BlockSpec((TB, 1), lambda i: (i, 0)))

    g = float(gamma)
    gamma_int = int(g) if (g.is_integer() and 0 <= g <= 16) else None
    reduce_tile = reduction in ("mean", "sum")

    if reduce_tile:
        # One f32 partial sum per tile; (1,1) trailing dims satisfy the
        # "block last two dims equal full array dims" rule.
        out_shape = jax.ShapeDtypeStruct((num_tiles, 1, 1), jnp.float32)
        out_specs = pl.BlockSpec((1, 1, 1), lambda i: (i, 0, 0))
    else:
        out_shape = jax.ShapeDtypeStruct((B_pad, 1), jnp.float32)
        out_specs = pl.BlockSpec((TB, 1), lambda i: (i, 0))

    out = pl.pallas_call(
        _make_focal_kernel(g, gamma_int, has_alpha, reduce_tile),
        out_shape=out_shape,
        grid_spec=pltpu.PrefetchScalarGridSpec(
            num_scalar_prefetch=0,
            grid=(num_tiles,),
            in_specs=in_specs,
            out_specs=out_specs,
        ),
        compiler_params=pltpu.CompilerParams(
            dimension_semantics=("parallel",),
            vmem_limit_bytes=int(usable),
        ),
    )(*args)

    if reduction == "mean":
        return jnp.sum(out) / jnp.float32(B)   # padded rows contribute 0
    if reduction == "sum":
        return jnp.sum(out)
    return out[:B, 0]


def _reference_focal_loss(inputs, targets, alpha=None, gamma=2.0, reduction="mean"):
    inputs = inputs.astype(jnp.float32)
    log_probs = jax.nn.log_softmax(inputs, axis=1)
    probs = jnp.exp(log_probs)
    onehot = jax.nn.one_hot(targets, inputs.shape[1], dtype=inputs.dtype)
    p_t = jnp.sum(probs * onehot, axis=1)
    logp_t = jnp.sum(log_probs * onehot, axis=1)
    if alpha is None:
        a_t = 1.0
    else:
        a_vec = (jnp.full((inputs.shape[1],), float(alpha), dtype=jnp.float32)
                 if isinstance(alpha, (float, int))
                 else jnp.asarray(alpha, dtype=jnp.float32))
        a_t = a_vec[targets]
    loss = -a_t * (1.0 - p_t) ** gamma * logp_t
    if reduction == "mean":
        return loss.mean()
    if reduction == "sum":
        return loss.sum()
    return loss


if __name__ == "__main__":
    key = jax.random.PRNGKey(0)
    k1, k2, k3 = jax.random.split(key, 3)

    B, C = 8, 32
    logits = jax.random.normal(k1, (B, C), dtype=jnp.float32)
    labels = jax.random.randint(k2, (B,), 0, C, dtype=jnp.int32)

    # mean reduction, no alpha (module defaults) -> in-kernel tile reduction
    out = jax.block_until_ready(focal_loss(logits, labels, reduction="mean"))
    ref = _reference_focal_loss(logits, labels, reduction="mean")
    assert jnp.allclose(out, ref, atol=1e-5, rtol=1e-5), (out, ref)

    # sum reduction with per-class alpha (wrapper-side alpha gather)
    alpha_vec = jax.random.uniform(k3, (C,), dtype=jnp.float32) + 0.5
    out = jax.block_until_ready(
        focal_loss(logits, labels, alpha=alpha_vec, reduction="sum"))
    ref = _reference_focal_loss(logits, labels, alpha=alpha_vec, reduction="sum")
    assert jnp.allclose(out, ref, atol=1e-5, rtol=1e-5), (out, ref)

    # 'none' reduction with a batch size that needs padding (multi-tile grid)
    B2 = 10
    logits2 = jax.random.normal(k1, (B2, C), dtype=jnp.float32)
    labels2 = jax.random.randint(k2, (B2,), 0, C, dtype=jnp.int32)
    out = jax.block_until_ready(focal_loss(logits2, labels2, reduction="none"))
    ref = _reference_focal_loss(logits2, labels2, reduction="none")
    assert out.shape == (B2,)
    assert jnp.allclose(out, ref, atol=1e-5, rtol=1e-5), (out, ref)

    # scalar alpha + non-integer gamma + C not a multiple of 128 (lane masking)
    B3, C3 = 12, 100
    logits3 = jax.random.normal(k1, (B3, C3), dtype=jnp.float32)
    labels3 = jax.random.randint(k2, (B3,), 0, C3, dtype=jnp.int32)
    out = jax.block_until_ready(
        focal_loss(logits3, labels3, alpha=0.25, gamma=1.5, reduction="mean"))
    ref = _reference_focal_loss(logits3, labels3, alpha=0.25, gamma=1.5,
                                reduction="mean")
    assert jnp.allclose(out, ref, atol=1e-5, rtol=1e-5), (out, ref)

    # bf16 logits: native-dtype DMA, f32 math inside the kernel
    logits_bf16 = logits.astype(jnp.bfloat16)
    out = jax.block_until_ready(focal_loss(logits_bf16, labels, reduction="mean"))
    ref = _reference_focal_loss(logits_bf16.astype(jnp.float32), labels,
                                reduction="mean")
    assert jnp.allclose(out, ref, atol=1e-4, rtol=1e-4), (out, ref)

    print("KERNEL_OK")
</pallas_src>

<mosaic_0001>
module attributes {stable_mosaic.version = 11 : i64} {
  func.func @kernel(%arg0: i32, %arg1: memref<8x32xf32, #tpu.memory_space<vmem>>, %arg2: memref<8x1xi32, #tpu.memory_space<vmem>>, %arg3: memref<1x1x1xf32, #tpu.memory_space<vmem>>) attributes {dimension_semantics = [#tpu.dimension_semantics<parallel>], iteration_bounds = array<i64: 1>, scalar_prefetch = 0 : i64, scratch_operands = 0 : i64, tpu.core_type = #tpu.core_type<tc>, window_params = [{transform_indices = @transform_0, window_bounds = array<i64: 8, 32>}, {transform_indices = @transform_1, window_bounds = array<i64: 8, 1>}, {transform_indices = @transform_2, window_bounds = array<i64: 1, 1, 1>}]} {
    %c0 = arith.constant 0 : index
    %c0_0 = arith.constant 0 : index
    %0 = vector.load %arg1[%c0, %c0_0] : memref<8x32xf32, #tpu.memory_space<vmem>>, vector<8x32xf32>
    %c0_1 = arith.constant 0 : index
    %c0_2 = arith.constant 0 : index
    %1 = vector.load %arg2[%c0_1, %c0_2] : memref<8x1xi32, #tpu.memory_space<vmem>>, vector<8x1xi32>
    %cst = arith.constant dense<0xFF800000> : vector<8xf32>
    %2 = vector.multi_reduction <maximumf>, %0, %cst [1] : vector<8x32xf32> to vector<8xf32>
    %3 = vector.shape_cast %2 : vector<8xf32> to vector<8x1xf32>
    %4 = vector.broadcast %3 : vector<8x1xf32> to vector<8x32xf32>
    %5 = arith.subf %0, %4 : vector<8x32xf32>
    %6 = math.exp %5 : vector<8x32xf32>
    %cst_3 = arith.constant dense<0.000000e+00> : vector<8xf32>
    %7 = vector.multi_reduction <add>, %6, %cst_3 [1] : vector<8x32xf32> to vector<8xf32>
    %8 = vector.shape_cast %7 : vector<8xf32> to vector<8x1xf32>
    %9 = math.log %8 : vector<8x1xf32>
    %10 = tpu.iota {dimensions = array<i32: 1>} : vector<8x32xi32>
    %11 = vector.broadcast %1 : vector<8x1xi32> to vector<8x32xi32>
    %12 = arith.cmpi eq, %10, %11 : vector<8x32xi32>
    %cst_4 = arith.constant 0.000000e+00 : f32
    %13 = vector.broadcast %cst_4 : f32 to vector<8x32xf32>
    %14 = arith.select %12, %5, %13 : vector<8x32xi1>, vector<8x32xf32>
    %cst_5 = arith.constant dense<0.000000e+00> : vector<8xf32>
    %15 = vector.multi_reduction <add>, %14, %cst_5 [1] : vector<8x32xf32> to vector<8xf32>
    %16 = vector.shape_cast %15 : vector<8xf32> to vector<8x1xf32>
    %17 = arith.subf %16, %9 : vector<8x1xf32>
    %18 = math.exp %17 : vector<8x1xf32>
    %cst_6 = arith.constant 1.000000e+00 : f32
    %19 = vector.broadcast %cst_6 : f32 to vector<8x1xf32>
    %20 = arith.subf %19, %18 : vector<8x1xf32>
    %cst_7 = arith.constant 0.000000e+00 : f32
    %21 = vector.broadcast %cst_7 : f32 to vector<8x1xf32>
    %22 = arith.maximumf %20, %21 : vector<8x1xf32>
    %23 = arith.mulf %22, %22 : vector<8x1xf32>
    %24 = arith.mulf %23, %17 : vector<8x1xf32>
    %c0_i32 = arith.constant 0 : i32
    %25 = vector.broadcast %c0_i32 : i32 to vector<8x1xi32>
    %26 = arith.cmpi sge, %1, %25 : vector<8x1xi32>
    %cst_8 = arith.constant 0.000000e+00 : f32
    %27 = vector.broadcast %cst_8 : f32 to vector<8x1xf32>
    %28 = arith.subf %27, %24 : vector<8x1xf32>
    %cst_9 = arith.constant 0.000000e+00 : f32
    %29 = vector.broadcast %cst_9 : f32 to vector<8x1xf32>
    %30 = arith.select %26, %28, %29 : vector<8x1xi1>, vector<8x1xf32>
    %cst_10 = arith.constant dense<0.000000e+00> : vector<1xf32>
    %31 = vector.multi_reduction <add>, %30, %cst_10 [0] : vector<8x1xf32> to vector<1xf32>
    %32 = vector.shape_cast %31 : vector<1xf32> to vector<1x1xf32>
    %c0_11 = arith.constant 0 : index
    %c0_12 = arith.constant 0 : index
    %c0_13 = arith.constant 0 : index
    %33 = vector.load %arg3[%c0_11, %c0_12, %c0_13] : memref<1x1x1xf32, #tpu.memory_space<vmem>>, vector<1x1x1xf32>
    %34 = vector.shape_cast %33 : vector<1x1x1xf32> to vector<1x1xf32>
    %35 = vector.shape_cast %32 : vector<1x1xf32> to vector<1x1x1xf32>
    tpu.vector_store %arg3[%c0_11, %c0_12, %c0_13], %35 {strides = array<i32>} : memref<1x1x1xf32, #tpu.memory_space<vmem>>, vector<1x1x1xf32>,
    return
  }
  func.func @transform_0(%arg0: i32) -> (i32, i32) {
    %c0_i32 = arith.constant 0 : i32
    %c0_i32_0 = arith.constant 0 : i32
    return %arg0, %c0_i32 : i32, i32
  }
  func.func @transform_1(%arg0: i32) -> (i32, i32) {
    %c0_i32 = arith.constant 0 : i32
    %c0_i32_0 = arith.constant 0 : i32
    return %arg0, %c0_i32 : i32, i32
  }
  func.func @transform_2(%arg0: i32) -> (i32, i32, i32) {
    %c0_i32 = arith.constant 0 : i32
    %c0_i32_0 = arith.constant 0 : i32
    %c0_i32_1 = arith.constant 0 : i32
    return %arg0, %c0_i32, %c0_i32_0 : i32, i32, i32
  }
}

</mosaic_0001>

<llo_original>
// kernel: tpu_custom_call.1
$region0: #{tpu_custom_call.1}
  #allocation0 [shape = 'u32[]', space=smem, size = 0x4, offset = 0x4, fixed_abs, tag = 'smem constant byte address 0x4 - core index']
  #allocation1 [shape = 'u32[72,128]{1,0:T(1,128)}', space=vmem, size = 0x9000, scoped, tag = 'internal scratch']
  %s0 = inlined_call_operand.vmem [shape: f32[8,32], index: 0, kind: input, shape index: {}]
  %s1 = inlined_call_operand.vmem [shape: s32[8,1], index: 1, kind: input, shape index: {}]
  %s2 = inlined_call_operand.hbm [shape: f32[1,1,1], index: 2, kind: output, shape index: {}]
  %s3 = sld [smem:[#allocation0]]
  $region18: #{tpu_custom_call.1} parent=0
    _
  %s5 = ssub.s32 1, %s3
  %s6 = scalar_select 0, %s5, %s3
  $region1: #{tpu_custom_call.1} parent=0
    #allocation2 [shape = 'u8[512]{0}', space=vmem, size = 0x400, scoped, tag = 'output window, operand 0, single buffered']
    #allocation3 [shape = 's32[1]{0}', space=sflag, size = 0x4, scoped, tag = 'scoped memory for tpu_custom_call.1']
    %7 = vsyncpa [#allocation3], 0
    // Predicated region
    $region2: #{tpu_custom_call.1} parent=1 // pred_check
      _
    $region3: #{tpu_custom_call.1} parent=1 // pred_check_branch
      %9 = sbr.rel (0) target = $region5
    $region4: #{tpu_custom_call.1} parent=1 // pred_region
      _
    $region5: #{tpu_custom_call.1} parent=1 // pred_fallthru
      _
    // Predicated region
    $region6: #{tpu_custom_call.1} parent=1 // pred_check
      _
    $region7: #{tpu_custom_call.1} parent=1 // pred_check_branch
      %11 = sbr.rel (0) target = $region9
    $region8: #{tpu_custom_call.1} parent=1 // pred_region
      _
    $region9: #{tpu_custom_call.1} parent=1 // pred_fallthru
      _
    %v12 = vld [vmem:[%s0] sm:$0xff]
    %v13 = vld [vmem:[%s1] sm:$0xff]
    %vm14 = vcmask 261120
    %v15 = vsel %vm14, %v12, -inf
    %16 = vmax.xlane.f32.xlu0 %v15
    %v17 = vpop.xlane.xlu0 %16
    %v18 = vsub.f32 %v12, %v17
    %v19 = vmul.f32 %v18, 1.442695
    %v20 = vpow.pop %v19
    %v21 = vsel %vm14, %v20, 0.0
    %22 = vadd.xlane.f32.xlu0 %v21
    %v23 = vpop.xlane.xlu0 %22
    %v24 = vlog2.pop %v23
    %v25 = vmul.f32 %v24, 0.6931472
    %v26 = vlaneseq
    %v27 = vand.u32 %v26, 127
    %28 = vset.pattern.permute.xlu0 0
    %29 = vperm.xlu0 %28, %v13
    %v30 = vpop.permute.xlu0 %29
    %vm31 = vcmp.eq.s32.totalorder %v27, %v30
    %v32 = vsel %vm31, %v18, 0.0
    %v33 = vsel %vm14, %v32, 0.0
    %34 = vadd.xlane.f32.xlu0 %v33
    %v35 = vpop.xlane.xlu0 %34
    %v36 = vsub.f32 %v35, %v25
    %v37 = vmul.f32 %v36, 1.442695
    %v38 = vpow.pop %v37
    %v39 = vsub.f32 1.0, %v38
    %v40 = vmax.f32 %v39, 0.0
    %v41 = vmul.f32 %v40, %v40
    %v42 = vmul.f32 %v41, %v36
    %vm43 = vcmp.ge.s32.totalorder %v13, 0
    %v44 = vsub.f32 0.0, %v42
    %v45 = vsel %vm43, %v44, 0.0
    %vm46 = vcmask 7168
    %v47 = vsel %vm46, %v45, 0.0
    %v48 = vrot.slane %v47, 4
    %v49 = vadd.f32 %v47, %v48
    %v50 = vrot.slane %v49, 2
    %v51 = vadd.f32 %v49, %v50
    %v52 = vrot.slane %v51, 1
    %v53 = vadd.f32 %v51, %v52
    %vm54 = vcmask 0
    %55 = vst.msk [vmem:[#allocation2] sm:$0x1] %vm54, %v53
    // Predicated region
    $region10: #{tpu_custom_call.1} parent=1 // pred_check
      _
    $region11: #{tpu_custom_call.1} parent=1 // pred_check_branch
      %57 = sbr.rel (0) target = $region13
    $region12: #{tpu_custom_call.1} parent=1 // pred_region
      %59 = vsyncadd [#allocation3], 0
      %s61 = sshll.u32 [#allocation2], 4
      %s62 = int_to_ptr.vmem [resolvable:$true] %s61
      %s63 = sshll.u32 %s2, 4
      %s64 = int_to_ptr.hbm [resolvable:$true] %s63
      %66 = dma.vmem_to_hbm [thread:$0]  %s62, 16, %s64, [#allocation3]
    $region13: #{tpu_custom_call.1} parent=1 // pred_fallthru
      _
    // Predicated region
    $region14: #{tpu_custom_call.1} parent=1 // pred_check
      _
    $region15: #{tpu_custom_call.1} parent=1 // pred_check_branch
      %68 = sbr.rel (0) target = $region17
    $region16: #{tpu_custom_call.1} parent=1 // pred_region
      %70 = dma.done [#allocation3], 16
    $region17: #{tpu_custom_call.1} parent=1 // pred_fallthru
      _
    %71 = vsyncpa [#allocation3], 1

</llo_original>
